<compile_context>
chip_gen: v7x
topology: tpu7x:2x2x1
jax: 0.10.0
libtpu: 0.0.40
codegen_flags: <defaults>
</compile_context>

<pallas_src>
import functools

import jax
import jax.numpy as jnp
from jax import lax
from jax.experimental import pallas as pl
from jax.experimental.pallas import tpu as pltpu


def _round_up(x: int, m: int) -> int:
    return ((x + m - 1) // m) * m


def _dice_kernel(preds_ref, labels_ref, out_ref, tp_acc, cnt_acc, sp_acc,
                 *, delta: float, num_classes: int):
    # preds_ref : (1, C, HW_TILE)  native dtype (f32 or bf16)
    # labels_ref: (1, 1, HW_TILE)  int32  (padded positions hold -1)
    # out_ref   : (1, 1, 128)      f32 per-batch loss (same value in all lanes)
    # *_acc     : (C, 1)           f32 VMEM accumulators (persist across HW tiles)
    t = pl.program_id(1)
    num_t = pl.num_programs(1)

    @pl.when(t == 0)
    def _():
        tp_acc[...] = jnp.zeros_like(tp_acc)
        cnt_acc[...] = jnp.zeros_like(cnt_acc)
        sp_acc[...] = jnp.zeros_like(sp_acc)

    preds = preds_ref[0].astype(jnp.float32)                  # (C, HW_TILE)
    labels = labels_ref[0]                                    # (1, HW_TILE) int32

    C = preds.shape[0]
    class_ids = lax.broadcasted_iota(jnp.int32, (C, 1), 0)    # (C, 1)
    onehot = labels == class_ids                               # (C, HW_TILE) bool

    # Three lane reductions per tile (XLU slot; essentially free next to the
    # VPU selects / HBM stream).
    tp_acc[...] += jnp.sum(jnp.where(onehot, preds, 0.0), axis=-1, keepdims=True)
    cnt_acc[...] += jnp.sum(jnp.where(onehot, 1.0, 0.0), axis=-1, keepdims=True)
    sp_acc[...] += jnp.sum(preds, axis=-1, keepdims=True)

    @pl.when(t == num_t - 1)
    def _():
        tp = tp_acc[...]                               # (C, 1)
        fn = cnt_acc[...] - tp                         # sum(onehot*(1-p))
        fp = sp_acc[...] - tp                          # sum((1-onehot)*p)
        dice = (tp + 1e-6) / (tp + delta * fn + (1.0 - delta) * fp + 1e-6)
        loss_b = jnp.sum(1.0 - dice) * (1.0 / num_classes)
        out_ref[...] = jnp.full(out_ref.shape, loss_b, dtype=out_ref.dtype)


def _dice_single(preds: jax.Array, labels: jax.Array, delta: float) -> jax.Array:
    """preds: (B, C, H, W) float, labels: (B, H, W) int -> scalar loss."""
    B, C, H, W = preds.shape
    HW = H * W
    preds_r = preds.reshape(B, C, HW)                       # keep native dtype
    labels_r = labels.astype(jnp.int32).reshape(B, 1, HW)

    # Spatial tile: multiple of 128, sized so double-buffered input tiles stay
    # small (<= ~8 MiB total) on every TPU generation.
    per_lane_bytes = C * preds_r.dtype.itemsize + 4          # preds + int32 label
    budget_bytes = 4 * 1024 * 1024                            # per buffer set
    max_lanes = max(128, budget_bytes // per_lane_bytes)
    hw128 = _round_up(HW, 128)
    hw_tile = 128
    while (hw_tile * 2 <= max_lanes and hw_tile * 2 <= hw128
           and hw_tile * 2 <= 32768):
        hw_tile *= 2
    hw_pad = _round_up(HW, hw_tile)
    if hw_pad != HW:
        pad = hw_pad - HW
        # Padded pixels: pred = 0 (no fp / sum-of-preds), label = -1 (never one-hot).
        preds_r = jnp.pad(preds_r, ((0, 0), (0, 0), (0, pad)))
        labels_r = jnp.pad(labels_r, ((0, 0), (0, 0), (0, pad)),
                           constant_values=-1)
    num_tiles = hw_pad // hw_tile

    kernel = functools.partial(_dice_kernel, delta=float(delta), num_classes=C)

    out = pl.pallas_call(
        kernel,
        out_shape=jax.ShapeDtypeStruct((B, 1, 128), jnp.float32),
        grid_spec=pltpu.PrefetchScalarGridSpec(
            num_scalar_prefetch=0,
            grid=(B, num_tiles),
            in_specs=[
                pl.BlockSpec((1, C, hw_tile), lambda b, t: (b, 0, t)),
                pl.BlockSpec((1, 1, hw_tile), lambda b, t: (b, 0, t)),
            ],
            out_specs=pl.BlockSpec((1, 1, 128), lambda b, t: (b, 0, 0)),
            scratch_shapes=[
                pltpu.VMEM((C, 1), jnp.float32),   # tp accumulator
                pltpu.VMEM((C, 1), jnp.float32),   # onehot-count accumulator
                pltpu.VMEM((C, 1), jnp.float32),   # sum(preds) accumulator
            ],
        ),
        compiler_params=pltpu.CompilerParams(
            dimension_semantics=("parallel", "arbitrary"),
            vmem_limit_bytes=32 * 1024 * 1024,
        ),
    )(preds_r, labels_r)

    # Batch mean over the per-batch partial losses (tiny, done in plain JAX).
    return jnp.mean(out[:, 0, 0])


def dice_loss(preds, labels, delta: float = 0.5, aux_weights=(1.0, 0.4, 0.4)):
    """Mirrors Dice.forward: accepts a single preds array or a tuple of them."""
    if isinstance(preds, (tuple, list)):
        return sum(w * _dice_single(p, labels, delta)
                   for p, w in zip(preds, aux_weights))
    return _dice_single(preds, labels, delta)


def _dice_ref(preds, labels, delta=0.5):
    """Pure-JAX reference for validation."""
    B, C, H, W = preds.shape
    onehot = jax.nn.one_hot(labels, C, dtype=jnp.float32)         # (B,H,W,C)
    onehot = jnp.transpose(onehot, (0, 3, 1, 2))                   # (B,C,H,W)
    p = preds.astype(jnp.float32)
    tp = jnp.sum(onehot * p, axis=(2, 3))
    fn = jnp.sum(onehot * (1 - p), axis=(2, 3))
    fp = jnp.sum((1 - onehot) * p, axis=(2, 3))
    dice = (tp + 1e-6) / (tp + delta * fn + (1 - delta) * fp + 1e-6)
    return jnp.mean(jnp.sum(1 - dice, axis=-1) / C)


if __name__ == "__main__":
    key = jax.random.PRNGKey(0)
    kp, kl = jax.random.split(key)

    # Primary small shape.
    B, C, H, W = 2, 4, 16, 16
    logits = jax.random.normal(kp, (B, C, H, W), dtype=jnp.float32)
    preds = jax.nn.softmax(logits, axis=1)
    labels = jax.random.randint(kl, (B, H, W), 0, C, dtype=jnp.int32)

    loss = jax.block_until_ready(dice_loss(preds, labels, delta=0.5))
    ref = _dice_ref(preds, labels, delta=0.5)
    assert jnp.allclose(loss, ref, atol=1e-5, rtol=1e-5), (loss, ref)

    # Exercise the multi-tile spatial reduction + padding path (HW=380 -> 2 tiles).
    kp2, kl2 = jax.random.split(jax.random.PRNGKey(1))
    B2, C2, H2, W2 = 2, 3, 20, 19
    logits2 = jax.random.normal(kp2, (B2, C2, H2, W2), dtype=jnp.float32)
    preds2 = jax.nn.softmax(logits2, axis=1)
    labels2 = jax.random.randint(kl2, (B2, H2, W2), 0, C2, dtype=jnp.int32)
    loss2 = jax.block_until_ready(dice_loss(preds2, labels2, delta=0.5))
    ref2 = _dice_ref(preds2, labels2, delta=0.5)
    assert jnp.allclose(loss2, ref2, atol=1e-5, rtol=1e-5), (loss2, ref2)

    # bf16 preds stream in native dtype (upcast only inside the kernel).
    preds_bf16 = preds.astype(jnp.bfloat16)
    loss_bf = jax.block_until_ready(dice_loss(preds_bf16, labels, delta=0.5))
    ref_bf = _dice_ref(preds_bf16.astype(jnp.float32), labels, delta=0.5)
    assert jnp.allclose(loss_bf, ref_bf, atol=1e-3, rtol=1e-3), (loss_bf, ref_bf)

    # Aux-output (tuple) path with the module's default aux weights.
    loss_tuple = jax.block_until_ready(
        dice_loss((preds, preds, preds), labels, delta=0.5))
    ref_tuple = (1.0 + 0.4 + 0.4) * ref
    assert jnp.allclose(loss_tuple, ref_tuple, atol=1e-5, rtol=1e-5), (
        loss_tuple, ref_tuple)

    print("KERNEL_OK")
</pallas_src>

<mosaic_0001>
module attributes {stable_mosaic.version = 11 : i64} {
  func.func @_dice_kernel(%arg0: i32, %arg1: i32, %arg2: memref<1x4x256xf32, #tpu.memory_space<vmem>>, %arg3: memref<1x1x256xi32, #tpu.memory_space<vmem>>, %arg4: memref<1x1x128xf32, #tpu.memory_space<vmem>>, %arg5: memref<4x1xf32, #tpu.memory_space<vmem>>, %arg6: memref<4x1xf32, #tpu.memory_space<vmem>>, %arg7: memref<4x1xf32, #tpu.memory_space<vmem>>) attributes {dimension_semantics = [#tpu.dimension_semantics<parallel>, #tpu.dimension_semantics<arbitrary>], iteration_bounds = array<i64: 2, 1>, scalar_prefetch = 0 : i64, scratch_operands = 3 : i64, tpu.core_type = #tpu.core_type<tc>, window_params = [{transform_indices = @transform_0, window_bounds = array<i64: 1, 4, 256>}, {transform_indices = @transform_1, window_bounds = array<i64: 1, 1, 256>}, {transform_indices = @transform_2, window_bounds = array<i64: 1, 1, 128>}]} {
    %c0_i32 = arith.constant 0 : i32
    %0 = arith.cmpi eq, %arg1, %c0_i32 : i32
    %1 = arith.extui %0 : i1 to i32
    %c0_i32_0 = arith.constant 0 : i32
    %2 = arith.cmpi ne, %1, %c0_i32_0 : i32
    scf.if %2 {
      %cst_25 = arith.constant 0.000000e+00 : f32
      %34 = vector.broadcast %cst_25 : f32 to vector<4x1xf32>
      %c0_26 = arith.constant 0 : index
      %c0_27 = arith.constant 0 : index
      %35 = vector.load %arg5[%c0_26, %c0_27] : memref<4x1xf32, #tpu.memory_space<vmem>>, vector<4x1xf32>
      tpu.vector_store %arg5[%c0_26, %c0_27], %34 {strides = array<i32>} : memref<4x1xf32, #tpu.memory_space<vmem>>, vector<4x1xf32>,
      %cst_28 = arith.constant 0.000000e+00 : f32
      %36 = vector.broadcast %cst_28 : f32 to vector<4x1xf32>
      %c0_29 = arith.constant 0 : index
      %c0_30 = arith.constant 0 : index
      %37 = vector.load %arg6[%c0_29, %c0_30] : memref<4x1xf32, #tpu.memory_space<vmem>>, vector<4x1xf32>
      tpu.vector_store %arg6[%c0_29, %c0_30], %36 {strides = array<i32>} : memref<4x1xf32, #tpu.memory_space<vmem>>, vector<4x1xf32>,
      %cst_31 = arith.constant 0.000000e+00 : f32
      %38 = vector.broadcast %cst_31 : f32 to vector<4x1xf32>
      %c0_32 = arith.constant 0 : index
      %c0_33 = arith.constant 0 : index
      %39 = vector.load %arg7[%c0_32, %c0_33] : memref<4x1xf32, #tpu.memory_space<vmem>>, vector<4x1xf32>
      tpu.vector_store %arg7[%c0_32, %c0_33], %38 {strides = array<i32>} : memref<4x1xf32, #tpu.memory_space<vmem>>, vector<4x1xf32>,
    } else {
    }
    %c0 = arith.constant 0 : index
    %c0_1 = arith.constant 0 : index
    %c0_2 = arith.constant 0 : index
    %3 = vector.load %arg2[%c0, %c0_1, %c0_2] : memref<1x4x256xf32, #tpu.memory_space<vmem>>, vector<1x4x256xf32>
    %4 = vector.shape_cast %3 : vector<1x4x256xf32> to vector<4x256xf32>
    %c0_3 = arith.constant 0 : index
    %c0_4 = arith.constant 0 : index
    %c0_5 = arith.constant 0 : index
    %5 = vector.load %arg3[%c0_3, %c0_4, %c0_5] : memref<1x1x256xi32, #tpu.memory_space<vmem>>, vector<1x1x256xi32>
    %6 = vector.shape_cast %5 : vector<1x1x256xi32> to vector<1x256xi32>
    %7 = tpu.iota {dimensions = array<i32: 0>} : vector<4x1xi32>
    %8 = vector.broadcast %6 : vector<1x256xi32> to vector<4x256xi32>
    %9 = vector.broadcast %7 : vector<4x1xi32> to vector<4x256xi32>
    %10 = arith.cmpi eq, %8, %9 : vector<4x256xi32>
    %c0_6 = arith.constant 0 : index
    %c0_7 = arith.constant 0 : index
    %11 = vector.load %arg5[%c0_6, %c0_7] : memref<4x1xf32, #tpu.memory_space<vmem>>, vector<4x1xf32>
    %cst = arith.constant 0.000000e+00 : f32
    %12 = vector.broadcast %cst : f32 to vector<4x256xf32>
    %13 = arith.select %10, %4, %12 : vector<4x256xi1>, vector<4x256xf32>
    %cst_8 = arith.constant dense<0.000000e+00> : vector<4xf32>
    %14 = vector.multi_reduction <add>, %13, %cst_8 [1] : vector<4x256xf32> to vector<4xf32>
    %15 = vector.shape_cast %14 : vector<4xf32> to vector<4x1xf32>
    %16 = arith.addf %11, %15 : vector<4x1xf32>
    %c0_9 = arith.constant 0 : index
    %c0_10 = arith.constant 0 : index
    %17 = vector.load %arg5[%c0_9, %c0_10] : memref<4x1xf32, #tpu.memory_space<vmem>>, vector<4x1xf32>
    tpu.vector_store %arg5[%c0_9, %c0_10], %16 {strides = array<i32>} : memref<4x1xf32, #tpu.memory_space<vmem>>, vector<4x1xf32>,
    %c0_11 = arith.constant 0 : index
    %c0_12 = arith.constant 0 : index
    %18 = vector.load %arg6[%c0_11, %c0_12] : memref<4x1xf32, #tpu.memory_space<vmem>>, vector<4x1xf32>
    %cst_13 = arith.constant 1.000000e+00 : f32
    %cst_14 = arith.constant 0.000000e+00 : f32
    %19 = vector.broadcast %cst_13 : f32 to vector<4x256xf32>
    %20 = vector.broadcast %cst_14 : f32 to vector<4x256xf32>
    %21 = arith.select %10, %19, %20 : vector<4x256xi1>, vector<4x256xf32>
    %cst_15 = arith.constant dense<0.000000e+00> : vector<4xf32>
    %22 = vector.multi_reduction <add>, %21, %cst_15 [1] : vector<4x256xf32> to vector<4xf32>
    %23 = vector.shape_cast %22 : vector<4xf32> to vector<4x1xf32>
    %24 = arith.addf %18, %23 : vector<4x1xf32>
    %c0_16 = arith.constant 0 : index
    %c0_17 = arith.constant 0 : index
    %25 = vector.load %arg6[%c0_16, %c0_17] : memref<4x1xf32, #tpu.memory_space<vmem>>, vector<4x1xf32>
    tpu.vector_store %arg6[%c0_16, %c0_17], %24 {strides = array<i32>} : memref<4x1xf32, #tpu.memory_space<vmem>>, vector<4x1xf32>,
    %c0_18 = arith.constant 0 : index
    %c0_19 = arith.constant 0 : index
    %26 = vector.load %arg7[%c0_18, %c0_19] : memref<4x1xf32, #tpu.memory_space<vmem>>, vector<4x1xf32>
    %cst_20 = arith.constant dense<0.000000e+00> : vector<4xf32>
    %27 = vector.multi_reduction <add>, %4, %cst_20 [1] : vector<4x256xf32> to vector<4xf32>
    %28 = vector.shape_cast %27 : vector<4xf32> to vector<4x1xf32>
    %29 = arith.addf %26, %28 : vector<4x1xf32>
    %c0_21 = arith.constant 0 : index
    %c0_22 = arith.constant 0 : index
    %30 = vector.load %arg7[%c0_21, %c0_22] : memref<4x1xf32, #tpu.memory_space<vmem>>, vector<4x1xf32>
    tpu.vector_store %arg7[%c0_21, %c0_22], %29 {strides = array<i32>} : memref<4x1xf32, #tpu.memory_space<vmem>>, vector<4x1xf32>,
    %c0_i32_23 = arith.constant 0 : i32
    %31 = arith.cmpi eq, %arg1, %c0_i32_23 : i32
    %32 = arith.extui %31 : i1 to i32
    %c0_i32_24 = arith.constant 0 : i32
    %33 = arith.cmpi ne, %32, %c0_i32_24 : i32
    scf.if %33 {
      %c0_25 = arith.constant 0 : index
      %c0_26 = arith.constant 0 : index
      %34 = vector.load %arg5[%c0_25, %c0_26] : memref<4x1xf32, #tpu.memory_space<vmem>>, vector<4x1xf32>
      %c0_27 = arith.constant 0 : index
      %c0_28 = arith.constant 0 : index
      %35 = vector.load %arg6[%c0_27, %c0_28] : memref<4x1xf32, #tpu.memory_space<vmem>>, vector<4x1xf32>
      %36 = arith.subf %35, %34 : vector<4x1xf32>
      %c0_29 = arith.constant 0 : index
      %c0_30 = arith.constant 0 : index
      %37 = vector.load %arg7[%c0_29, %c0_30] : memref<4x1xf32, #tpu.memory_space<vmem>>, vector<4x1xf32>
      %38 = arith.subf %37, %34 : vector<4x1xf32>
      %cst_31 = arith.constant 9.99999997E-7 : f32
      %39 = vector.broadcast %cst_31 : f32 to vector<4x1xf32>
      %40 = arith.addf %34, %39 : vector<4x1xf32>
      %cst_32 = arith.constant 5.000000e-01 : f32
      %41 = vector.broadcast %cst_32 : f32 to vector<4x1xf32>
      %42 = arith.mulf %41, %36 : vector<4x1xf32>
      %43 = arith.addf %34, %42 : vector<4x1xf32>
      %cst_33 = arith.constant 5.000000e-01 : f32
      %44 = vector.broadcast %cst_33 : f32 to vector<4x1xf32>
      %45 = arith.mulf %44, %38 : vector<4x1xf32>
      %46 = arith.addf %43, %45 : vector<4x1xf32>
      %cst_34 = arith.constant 9.99999997E-7 : f32
      %47 = vector.broadcast %cst_34 : f32 to vector<4x1xf32>
      %48 = arith.addf %46, %47 : vector<4x1xf32>
      %49 = arith.divf %40, %48 : vector<4x1xf32>
      %cst_35 = arith.constant 1.000000e+00 : f32
      %50 = vector.broadcast %cst_35 : f32 to vector<4x1xf32>
      %51 = arith.subf %50, %49 : vector<4x1xf32>
      %52 = vector.shape_cast %51 : vector<4x1xf32> to vector<1x4x1xf32>
      %cst_36 = arith.constant dense<0.000000e+00> : vector<1xf32>
      %53 = vector.multi_reduction <add>, %52, %cst_36 [1, 2] : vector<1x4x1xf32> to vector<1xf32>
      %54 = vector.shape_cast %53 : vector<1xf32> to vector<1x1x1xf32>
      %55 = vector.extract %54[0, 0, 0] : f32 from vector<1x1x1xf32>
      %cst_37 = arith.constant 2.500000e-01 : f32
      %56 = arith.mulf %55, %cst_37 : f32
      %57 = vector.broadcast %56 : f32 to vector<1x1x128xf32>
      %c0_38 = arith.constant 0 : index
      %c0_39 = arith.constant 0 : index
      %c0_40 = arith.constant 0 : index
      %58 = vector.load %arg4[%c0_38, %c0_39, %c0_40] : memref<1x1x128xf32, #tpu.memory_space<vmem>>, vector<1x1x128xf32>
      tpu.vector_store %arg4[%c0_38, %c0_39, %c0_40], %57 {strides = array<i32>} : memref<1x1x128xf32, #tpu.memory_space<vmem>>, vector<1x1x128xf32>,
    } else {
    }
    return
  }
  func.func @transform_0(%arg0: i32, %arg1: i32) -> (i32, i32, i32) {
    %c0_i32 = arith.constant 0 : i32
    %c0_i32_0 = arith.constant 0 : i32
    return %arg0, %c0_i32, %arg1 : i32, i32, i32
  }
  func.func @transform_1(%arg0: i32, %arg1: i32) -> (i32, i32, i32) {
    %c0_i32 = arith.constant 0 : i32
    %c0_i32_0 = arith.constant 0 : i32
    return %arg0, %c0_i32, %arg1 : i32, i32, i32
  }
  func.func @transform_2(%arg0: i32, %arg1: i32) -> (i32, i32, i32) {
    %c0_i32 = arith.constant 0 : i32
    %c0_i32_0 = arith.constant 0 : i32
    %c0_i32_1 = arith.constant 0 : i32
    return %arg0, %c0_i32, %c0_i32_0 : i32, i32, i32
  }
}

</mosaic_0001>

<llo_original>
// kernel: tpu_custom_call.1
$region0: #{tpu_custom_call.1}
  #allocation0 [shape = 'u32[]', space=smem, size = 0x4, offset = 0x4, fixed_abs, tag = 'smem constant byte address 0x4 - core index']
  #allocation1 [shape = 'u32[144,128]{1,0:T(1,128)}', space=vmem, size = 0x12000, scoped, tag = 'internal scratch']
  #allocation2 [shape = 'f32[4,1]{1,0:T(4,128)}', space=vmem, size = 0x800, scoped, tag = 'scratch operand']
  #allocation3 [shape = 'f32[4,1]{1,0:T(4,128)}', space=vmem, size = 0x800, scoped, tag = 'scratch operand']
  #allocation4 [shape = 'f32[4,1]{1,0:T(4,128)}', space=vmem, size = 0x800, scoped, tag = 'scratch operand']
  %s0 = inlined_call_operand.hbm [shape: f32[2,4,256], index: 0, kind: input, shape index: {}]
  %s1 = inlined_call_operand.hbm [shape: s32[2,1,256], index: 1, kind: input, shape index: {}]
  %s2 = inlined_call_operand.hbm [shape: f32[2,1,128], index: 2, kind: output, shape index: {}]
  %s3 = sld [smem:[#allocation0]]
  $region57: #{tpu_custom_call.1} parent=0
    _
  %s5 = ssub.s32 1, %s3
  %s6 = scalar_select 0, %s5, %s3
  $region1: #{tpu_custom_call.1} parent=0
    #allocation5 [shape = 'u8[8192]{0}', space=vmem, size = 0x2000, scoped, tag = 'input window, operand 0']
    #allocation6 [shape = 's32[2]{0}', space=sflag, size = 0x8, scoped, tag = 'scoped memory for tpu_custom_call.1']
    #allocation7 [shape = 's32[2]{0}', space=sflag, size = 0x8, scoped, tag = 'scoped memory for tpu_custom_call.1']
    #allocation8 [shape = 'u8[2048]{0}', space=vmem, size = 0x800, scoped, tag = 'input window, operand 1']
    #allocation9 [shape = 's32[2]{0}', space=sflag, size = 0x8, scoped, tag = 'scoped memory for tpu_custom_call.1']
    #allocation10 [shape = 'u8[1024]{0}', space=vmem, size = 0x400, scoped, tag = 'output window, operand 0']
    %7 = vsyncpa [#allocation6], 0
    %s8 = scalar_lea.sflag [#allocation6], 1
    %9 = vsyncpa %s8, 0
    %10 = vsyncpa [#allocation9], 0
    %s11 = scalar_lea.sflag [#allocation9], 1
    %12 = vsyncpa %s11, 0
    %13 = vsyncpa [#allocation7], 0
    %s14 = scalar_lea.sflag [#allocation7], 1
    %15 = vsyncpa %s14, 0
    loop: start=0, step=1, limit=4
    $region2: #{tpu_custom_call.1} parent=1 // loop_pre_header
      _
    $region3: #{tpu_custom_call.1} parent=1 // loop_header
      %s17 = sphi 0, %s21
      %p18 = scmp.ge.s32.totalorder %s17, 4
      %s24 = sphi 0, %s36
      %s25 = sphi 0, %s32
      %s26 = sphi 0, %s24
      %s27 = sphi 0, %s25
      %s28 = sphi 0, %s26
      %s29 = sphi 0, %s27
      %s41 = sphi 0, %s43
      %s44 = sphi 0, %s41
      %s45 = sphi 0, %s44
      %s61 = sphi 0, %s45
      %s69 = sphi 0, %s71
      %s72 = sphi 0, %s69
      %s73 = sphi 0, %s72
      %s89 = sphi 0, %s73
      %s95 = sphi 0, %s97
      %s98 = sphi 0, %s95
      %s99 = sphi 0, %s98
      %s115 = sphi 0, %s99
    $region4: #{tpu_custom_call.1} parent=1 // loop_header_branch
      %20 = sbr.rel (%p18) target = $region8
    $region5: #{tpu_custom_call.1} parent=1 // loop_body
      %s22 = ssub.s32 %s17, 1
      %s23 = ssub.s32 %s17, 2
      %s30 = sadd.s32 1, %s25
      %p31 = scmp.ge.s32.totalorder %s30, 1
      %s32 = scalar_select %p31, 0, %s30
      %s33 = sadd.s32 1, %s24
      %s34 = scalar_select %p31, %s33, %s24
      %p35 = scmp.ge.s32.totalorder %s34, 2
      %s36 = scalar_select %p35, 0, %s34
      %s37 = ssub.s32 %s24, %s36
      %s38 = ssub.s32 %s25, %s32
      %s39 = sor.u32 %s37, %s38
      %p40 = scmp.eq.s32.totalorder %s39, 0
      %s42 = sadd.s32 %s41, 1
      %s43 = scalar_select %p40, %s41, %s42
      %p46 = pneg %p40
      %p47 = scmp.eq.s32.totalorder %s17, 1
      %p48 = por %p46, %p47
      %p49 = scmp.ne.s32.totalorder %s41, %s44
      %p50 = scmp.eq.s32.totalorder %s17, 0
      %p51 = por %p49, %p50
      %p52 = scmp.ne.s32.totalorder %s41, %s44
      %p53 = scmp.eq.s32.totalorder %s22, 1
      %p54 = por %p52, %p53
      %p55 = scmp.ne.s32.totalorder %s44, %s45
      %p56 = scmp.eq.s32.totalorder %s22, 0
      %p57 = por %p55, %p56
      %p58 = scmp.ne.s32.totalorder %s44, %s45
      %p59 = scmp.eq.s32.totalorder %s23, 1
      %p60 = por %p58, %p59
      %p62 = scmp.ne.s32.totalorder %s45, %s61
      %p63 = scmp.eq.s32.totalorder %s23, 0
      %p64 = por %p62, %p63
      %s65 = ssub.s32 %s24, %s36
      %s66 = ssub.s32 %s25, %s32
      %s67 = sor.u32 %s65, %s66
      %p68 = scmp.eq.s32.totalorder %s67, 0
      %s70 = sadd.s32 %s69, 1
      %s71 = scalar_select %p68, %s69, %s70
      %p74 = pneg %p68
      %p75 = scmp.eq.s32.totalorder %s17, 1
      %p76 = por %p74, %p75
      %p77 = scmp.ne.s32.totalorder %s69, %s72
      %p78 = scmp.eq.s32.totalorder %s17, 0
      %p79 = por %p77, %p78
      %p80 = scmp.ne.s32.totalorder %s69, %s72
      %p81 = scmp.eq.s32.totalorder %s22, 1
      %p82 = por %p80, %p81
      %p83 = scmp.ne.s32.totalorder %s72, %s73
      %p84 = scmp.eq.s32.totalorder %s22, 0
      %p85 = por %p83, %p84
      %p86 = scmp.ne.s32.totalorder %s72, %s73
      %p87 = scmp.eq.s32.totalorder %s23, 1
      %p88 = por %p86, %p87
      %p90 = scmp.ne.s32.totalorder %s73, %s89
      %p91 = scmp.eq.s32.totalorder %s23, 0
      %p92 = por %p90, %p91
      %s93 = ssub.s32 %s24, %s36
      %p94 = scmp.eq.s32.totalorder %s93, 0
      %s96 = sadd.s32 %s95, 1
      %s97 = scalar_select %p94, %s95, %s96
      %p100 = pneg %p94
      %p101 = scmp.eq.s32.totalorder %s17, 1
      %p102 = por %p100, %p101
      %p103 = scmp.ne.s32.totalorder %s95, %s98
      %p104 = scmp.eq.s32.totalorder %s17, 0
      %p105 = por %p103, %p104
      %p106 = scmp.ne.s32.totalorder %s95, %s98
      %p107 = scmp.eq.s32.totalorder %s22, 1
      %p108 = por %p106, %p107
      %p109 = scmp.ne.s32.totalorder %s98, %s99
      %p110 = scmp.eq.s32.totalorder %s22, 0
      %p111 = por %p109, %p110
      %p112 = scmp.ne.s32.totalorder %s98, %s99
      %p113 = scmp.eq.s32.totalorder %s23, 1
      %p114 = por %p112, %p113
      %p116 = scmp.ne.s32.totalorder %s99, %s115
      %p117 = scmp.eq.s32.totalorder %s23, 0
      %p118 = por %p116, %p117
      %p119 = scmp.le.s32.totalorder 1, %s17
      %p120 = scmp.lt.s32.totalorder %s17, 3
      %p121 = pnand %p119, %p120
      %p122 = pneg %p121
      // Predicated region
      $region9: #{tpu_custom_call.1} parent=5 // pred_check
        _
      $region10: #{tpu_custom_call.1} parent=5 // pred_check_branch
        %124 = sbr.rel (%p121) target = $region12
      $region11: #{tpu_custom_call.1} parent=5 // pred_region
        %s125 = ssub.s32 %s17, 1
      $region12: #{tpu_custom_call.1} parent=5 // pred_fallthru
        _
      %p126 = scmp.lt.s32.totalorder %s17, 2
      // Predicated region
      $region13: #{tpu_custom_call.1} parent=5 // pred_check
        %p127 = pneg %p126
      $region14: #{tpu_custom_call.1} parent=5 // pred_check_branch
        %129 = sbr.rel (%p127) target = $region16
      $region15: #{tpu_custom_call.1} parent=5 // pred_region
        // Predicated region
        $region17: #{tpu_custom_call.1} parent=15 // pred_check
          %p130 = pneg %p51
        $region18: #{tpu_custom_call.1} parent=15 // pred_check_branch
          %132 = sbr.rel (%p130) target = $region20
        $region19: #{tpu_custom_call.1} parent=15 // pred_region
          %s133 = sand.u32 %s41, 1
          %s134 = scalar_lea.sflag [#allocation6], %s133
          %s135 = sand.u32 %s41, 1
          %s136 = smul.addr %s135, 8
          %s137 = scalar_lea.vmem [#allocation5], %s136
          %s138 = smul.u32 2, %s25
          %s140 = ssub.s32 128, 128
          %141 = vsyncadd %s134, %s140
          %s142 = smul.addr %s24, 2
          %s143 = sadd.s32 %s138, %s142
          %s144 = smul.addr %s143, 64
          %s145 = scalar_lea.hbm %s0, %s144
          %s147 = sshll.u32 %s137, 4
          %s148 = int_to_ptr.vmem [resolvable:$true] %s147
          %150 = dma.hbm_to_vmem [thread:$0]  %s145, 128, %s148, %s134
        $region20: #{tpu_custom_call.1} parent=15 // pred_fallthru
          _
        // Predicated region
        $region21: #{tpu_custom_call.1} parent=15 // pred_check
          %p151 = pneg %p79
        $region22: #{tpu_custom_call.1} parent=15 // pred_check_branch
          %153 = sbr.rel (%p151) target = $region24
        $region23: #{tpu_custom_call.1} parent=15 // pred_region
          %s154 = sand.u32 %s69, 1
          %s155 = scalar_lea.sflag [#allocation9], %s154
          %s156 = sand.u32 %s69, 1
          %s157 = smul.addr %s156, 2
          %s158 = scalar_lea.vmem [#allocation8], %s157
          %s159 = smul.u32 2, %s25
          %s161 = ssub.s32 32, 32
          %162 = vsyncadd %s155, %s161
          %s163 = smul.addr %s24, 2
          %s164 = sadd.s32 %s159, %s163
          %s165 = smul.addr %s164, 16
          %s166 = scalar_lea.hbm %s1, %s165
          %s168 = sshll.u32 %s158, 4
          %s169 = int_to_ptr.vmem [resolvable:$true] %s168
          %171 = dma.hbm_to_vmem [thread:$0]  %s166, 32, %s169, %s155
        $region24: #{tpu_custom_call.1} parent=15 // pred_fallthru
          _
      $region16: #{tpu_custom_call.1} parent=5 // pred_fallthru
        _
      %p172 = scmp.le.s32.totalorder 1, %s17
      %p173 = scmp.lt.s32.totalorder %s17, 3
      %p174 = pnand %p172, %p173
      %p175 = pneg %p174
      // Predicated region
      $region25: #{tpu_custom_call.1} parent=5 // pred_check
        _
      $region26: #{tpu_custom_call.1} parent=5 // pred_check_branch
        %177 = sbr.rel (%p174) target = $region28
      $region27: #{tpu_custom_call.1} parent=5 // pred_region
        %s178 = ssub.s32 %s17, 1
        %s179 = sand.u32 %s44, 1
        %s180 = scalar_lea.sflag [#allocation6], %s179
        %s181 = sand.u32 %s44, 1
        %s182 = smul.addr %s181, 8
        %s183 = scalar_lea.vmem [#allocation5], %s182
        // Predicated region
        $region29: #{tpu_custom_call.1} parent=27 // pred_check
          %p184 = pneg %p57
        $region30: #{tpu_custom_call.1} parent=27 // pred_check_branch
          %186 = sbr.rel (%p184) target = $region32
        $region31: #{tpu_custom_call.1} parent=27 // pred_region
          %187 = dma.done %s180, 128
        $region32: #{tpu_custom_call.1} parent=27 // pred_fallthru
          _
        %s188 = sand.u32 %s72, 1
        %s189 = scalar_lea.sflag [#allocation9], %s188
        %s190 = sand.u32 %s72, 1
        %s191 = smul.addr %s190, 2
        %s192 = scalar_lea.vmem [#allocation8], %s191
        // Predicated region
        $region33: #{tpu_custom_call.1} parent=27 // pred_check
          %p193 = pneg %p85
        $region34: #{tpu_custom_call.1} parent=27 // pred_check_branch
          %195 = sbr.rel (%p193) target = $region36
        $region35: #{tpu_custom_call.1} parent=27 // pred_region
          %196 = dma.done %s189, 32
        $region36: #{tpu_custom_call.1} parent=27 // pred_fallthru
          _
        %s197 = sand.u32 %s44, 1
        %s198 = scalar_lea.sflag [#allocation6], %s197
        %s199 = sand.u32 %s44, 1
        %s200 = smul.addr %s199, 8
        %s201 = scalar_lea.vmem [#allocation5], %s200
        %p202 = pneg %p57
        %p203 = pneg %p54
        %s204 = sand.u32 %s72, 1
        %s205 = scalar_lea.sflag [#allocation9], %s204
        %s206 = sand.u32 %s72, 1
        %s207 = smul.addr %s206, 2
        %s208 = scalar_lea.vmem [#allocation8], %s207
        %p209 = pneg %p85
        %p210 = pneg %p82
        %p211 = pneg %p111
        %p212 = pneg %p108
        %s213 = sand.u32 %s98, 1
        %s214 = scalar_lea.sflag [#allocation7], %s213
        %s215 = sand.u32 %s98, 1
        %s216 = scalar_lea.vmem [#allocation10], %s215
        %s217 = smul.u32 2, %s27
        %s218 = smul.u32 2, %s27
        %p219 = scmp.eq.s32.totalorder %s27, 0
        // Predicated region
        $region37: #{tpu_custom_call.1} parent=27 // pred_check
          %p220 = pneg %p219
        $region38: #{tpu_custom_call.1} parent=27 // pred_check_branch
          %222 = sbr.rel (%p220) target = $region40
        $region39: #{tpu_custom_call.1} parent=27 // pred_region
          %vm223 = vcmask 3072
          %224 = vst.msk [vmem:[#allocation2] sm:$0xf] %vm223, 0.0
          %225 = vst.msk [vmem:[#allocation3] sm:$0xf] %vm223, 0.0
          %226 = vst.msk [vmem:[#allocation4] sm:$0xf] %vm223, 0.0
        $region40: #{tpu_custom_call.1} parent=27 // pred_fallthru
          _
        %v227 = vld [vmem:[%s183] sm:$0xff]
        %v228 = vld [vmem:[%s192] sm:$0x3]
        %v229 = vlaneseq
        %v230 = vshrl.u32 %v229, 7
        %v231 = vlaneseq
        %v232 = vshrl.u32 %v231, 7
        %v233 = vsub.s32 0, %v232
        %v234 = vrot.slane %v228, %v233
        %v235 = vlaneseq
        %v236 = vshrl.u32 %v235, 7
        %v237 = vsub.s32 1, %v236
        %v238 = vrot.slane %v228, %v237
        %vm239 = vcmp.eq.s32.totalorder %v234, %v230
        %vm240 = vcmp.eq.s32.totalorder %v238, %v230
        %v241 = vld [vmem:[#allocation2] sm:$0xf]
        %v243 = vcombine.high %v227, %v227
        %v245 = vsel %vm239, %v227, 0.0
        %v246 = vsel %vm240, %v243, 0.0
        %vm247 = vcmask 1043456
        %v248 = vsel %vm247, %v245, 0.0
        %v249 = vsel %vm247, %v246, 0.0
        %v250 = vadd.f32 %v248, %v249
        %251 = vadd.xlane.f32.xlu0 %v250
        %v252 = vpop.xlane.xlu0 %251
        %v253 = vadd.f32 %v241, %v252
        %vm254 = vcmask 3072
        %255 = vst.msk [vmem:[#allocation2] sm:$0xf] %vm254, %v253
        %v256 = vld [vmem:[#allocation3] sm:$0xf]
        %v257 = vsel %vm239, 1.0, 0.0
        %v258 = vsel %vm240, 1.0, 0.0
        %v259 = vsel %vm247, %v257, 0.0
        %v260 = vsel %vm247, %v258, 0.0
        %v261 = vadd.f32 %v259, %v260
        %262 = vadd.xlane.f32.xlu0 %v261
        %v263 = vpop.xlane.xlu0 %262
        %v264 = vadd.f32 %v256, %v263
        %265 = vst.msk [vmem:[#allocation3] sm:$0xf] %vm254, %v264
        %v266 = vld [vmem:[#allocation4] sm:$0xf]
        %v267 = vsel %vm247, %v227, 0.0
        %v268 = vsel %vm247, %v243, 0.0
        %v269 = vadd.f32 %v267, %v268
        %270 = vadd.xlane.f32.xlu0 %v269
        %v271 = vpop.xlane.xlu0 %270
        %v272 = vadd.f32 %v266, %v271
        %273 = vst.msk [vmem:[#allocation4] sm:$0xf] %vm254, %v272
        // Predicated region
        $region41: #{tpu_custom_call.1} parent=27 // pred_check
          %p274 = pneg %p219
        $region42: #{tpu_custom_call.1} parent=27 // pred_check_branch
          %276 = sbr.rel (%p274) target = $region44
        $region43: #{tpu_custom_call.1} parent=27 // pred_region
          %v277 = vld [vmem:[#allocation2] sm:$0xf]
          %v278 = vld [vmem:[#allocation3] sm:$0xf]
          %v279 = vsub.f32 %v278, %v277
          %v280 = vld [vmem:[#allocation4] sm:$0xf]
          %v281 = vsub.f32 %v280, %v277
          %v282 = vadd.f32 %v277, 1e-06
          %v283 = vmul.f32 %v279, 0.5
          %v284 = vadd.f32 %v277, %v283
          %v285 = vmul.f32 %v281, 0.5
          %v286 = vadd.f32 %v284, %v285
          %v287 = vadd.f32 %v286, 1e-06
          %v288 = vrcp.pop %v287
          %v289 = vmul.f32 %v282, %v288
          %v290 = vsub.f32 1.0, %v289
          %v291 = vsel %vm254, %v290, 0.0
          %292 = vadd.xlane.f32.xlu0 %v291
          %v293 = vpop.xlane.xlu0 %292
          %v294 = vrot.slane %v293, 4
          %v295 = vadd.f32 %v293, %v294
          %v296 = vrot.slane %v295, 2
          %v297 = vadd.f32 %v295, %v296
          %v298 = vrot.slane %v297, 1
          %v299 = vadd.f32 %v297, %v298
          %s300 = vtos %v299
          %s301 = smul.f32 %s300, 0.25
          %v302 = vstv %s301
          %303 = vst [vmem:[%s216] sm:$0x1] %v302
        $region44: #{tpu_custom_call.1} parent=27 // pred_fallthru
          _
        %s304 = sand.u32 %s98, 1
        %s305 = scalar_lea.sflag [#allocation7], %s304
        %s306 = sand.u32 %s98, 1
        %s307 = scalar_lea.vmem [#allocation10], %s306
        // Predicated region
        $region45: #{tpu_custom_call.1} parent=27 // pred_check
          %p308 = pneg %p108
        $region46: #{tpu_custom_call.1} parent=27 // pred_check_branch
          %310 = sbr.rel (%p308) target = $region48
        $region47: #{tpu_custom_call.1} parent=27 // pred_region
          %s312 = ssub.s32 16, 16
          %313 = vsyncadd %s305, %s312
          %s314 = smul.addr %s26, 16
          %s315 = scalar_lea.hbm %s2, %s314
          %s317 = sshll.u32 %s307, 4
          %s318 = int_to_ptr.vmem [resolvable:$true] %s317
          %320 = dma.vmem_to_hbm [thread:$0]  %s318, 16, %s315, %s305
        $region48: #{tpu_custom_call.1} parent=27 // pred_fallthru
          _
      $region28: #{tpu_custom_call.1} parent=5 // pred_fallthru
        _
      %p321 = scmp.le.s32.totalorder 2, %s17
      // Predicated region
      $region49: #{tpu_custom_call.1} parent=5 // pred_check
        %p322 = pneg %p321
      $region50: #{tpu_custom_call.1} parent=5 // pred_check_branch
        %324 = sbr.rel (%p322) target = $region52
      $region51: #{tpu_custom_call.1} parent=5 // pred_region
        %s325 = ssub.s32 %s17, 2
        // Predicated region
        $region53: #{tpu_custom_call.1} parent=51 // pred_check
          %p326 = pneg %p114
        $region54: #{tpu_custom_call.1} parent=51 // pred_check_branch
          %328 = sbr.rel (%p326) target = $region56
        $region55: #{tpu_custom_call.1} parent=51 // pred_region
          %s329 = sand.u32 %s99, 1
          %s330 = scalar_lea.sflag [#allocation7], %s329
          %s331 = sand.u32 %s99, 1
          %s332 = scalar_lea.vmem [#allocation10], %s331
          %333 = dma.done %s330, 16
        $region56: #{tpu_custom_call.1} parent=51 // pred_fallthru
          _
      $region52: #{tpu_custom_call.1} parent=5 // pred_fallthru
        _
    $region6: #{tpu_custom_call.1} parent=1 // loop_footer
      %s21 = sadd.s32 1, %s17
    $region7: #{tpu_custom_call.1} parent=1 // loop_footer_branch
      %16 = sbr.rel target = $region3
    $region8: #{tpu_custom_call.1} parent=1 // loop_exit
      _
    %334 = vsyncpa [#allocation6], 1
    %s335 = scalar_lea.sflag [#allocation6], 1
    %336 = vsyncpa %s335, 1
    %337 = vsyncpa [#allocation9], 1
    %s338 = scalar_lea.sflag [#allocation9], 1
    %339 = vsyncpa %s338, 1
    %340 = vsyncpa [#allocation7], 1
    %s341 = scalar_lea.sflag [#allocation7], 1
    %342 = vsyncpa %s341, 1

</llo_original>
